<compile_context>
chip_gen: v6e
topology: v6e:2x2x1
jax: 0.10.0
libtpu: 0.0.40
codegen_flags: <defaults>
</compile_context>

<pallas_src>
import functools
import math

import numpy as np
import jax
import jax.numpy as jnp
from jax.experimental import pallas as pl
from jax.experimental.pallas import tpu as pltpu

LANE = 128


def _round_up(x, m):
    return ((x + m - 1) // m) * m


def _mlp_kernel(x_ref, w_ref, b_ref, o_ref, *, n_layers):
    """Fused MLP forward on one batch tile.

    x_ref: (TM, Dp) f32 activations (lane-padded)
    w_ref: (L, Dp, Dp) packed, zero-padded weights (resident in VMEM; f32 or bf16)
    b_ref: (L, Dp)     packed, zero-padded biases  (resident in VMEM; f32)
    o_ref: (TM, Dp) f32 output (lane-dense store; wrapper slices real dims)
    """
    bf16_weights = (w_ref.dtype == jnp.bfloat16)
    a = x_ref[...]                                   # f32
    for i in range(n_layers):
        w = w_ref[i]                                 # (Dp, Dp)
        b = b_ref[pl.ds(i, 1), :]                    # (1, Dp), broadcasts over rows
        lhs = a.astype(jnp.bfloat16) if bf16_weights else a
        z = jnp.dot(lhs, w, preferred_element_type=jnp.float32) + b
        a = jnp.tanh(z) if i < n_layers - 1 else z   # last layer: no activation
    o_ref[...] = a


def pack_params(weights, biases, *, param_dtype=jnp.float32):
    """One-time host-side packing of all layers into two contiguous operands.

    Returns (w_packed (L, Dp, Dp), b_packed (L, Dp), d_pad, out_dim).
    Use param_dtype=jnp.bfloat16 on v6e/v7x for the native MXU path (loosen
    the output tolerance accordingly).
    """
    n_layers = len(weights)
    dims = [int(w.shape[0]) for w in weights] + [int(weights[-1].shape[1])]
    d_pad = _round_up(max(dims), LANE)

    w_np = np.zeros((n_layers, d_pad, d_pad), np.float32)
    b_np = np.zeros((n_layers, d_pad), np.float32)
    for i, (w, b) in enumerate(zip(weights, biases)):
        w_host = np.asarray(w, np.float32)
        b_host = np.asarray(b, np.float32).reshape(-1)
        w_np[i, : w_host.shape[0], : w_host.shape[1]] = w_host
        b_np[i, : b_host.shape[0]] = b_host

    w_packed = jnp.asarray(w_np, dtype=param_dtype)
    b_packed = jnp.asarray(b_np, dtype=jnp.float32)
    return w_packed, b_packed, d_pad, dims[-1]


@functools.partial(jax.jit, static_argnames=("out_dim", "block_m"))
def net1_forward(x, w_packed, b_packed, *, out_dim, block_m=None):
    """x: (batch, in_dim) f32; w_packed/b_packed from pack_params()."""
    batch, in_dim = x.shape
    n_layers, d_pad, _ = w_packed.shape

    # Batch tiling: TM multiple of 8 (sublane). Aim for >= 2 grid steps so the
    # "parallel" axis feeds both v7x TensorCores, cap TM at 512 (fits VMEM on
    # every generation, minimizes per-step pipeline overhead on v5e/v6e).
    if block_m is None:
        tm = min(512, _round_up(max(pl.cdiv(batch, 2), 8), 8))
    else:
        tm = _round_up(min(block_m, batch), 8)
    batch_pad = _round_up(batch, tm)
    grid = (batch_pad // tm,)

    # Zero-padding is mathematically inert (tanh(0)=0, zero rows/cols).
    x_pad = jnp.pad(x.astype(jnp.float32),
                    ((0, batch_pad - batch), (0, d_pad - in_dim)))

    w_bytes = int(w_packed.size) * jnp.dtype(w_packed.dtype).itemsize
    cost = pl.CostEstimate(
        flops=2 * batch_pad * d_pad * d_pad * n_layers,
        transcendentals=batch_pad * d_pad * max(n_layers - 1, 0),
        bytes_accessed=(batch_pad * d_pad * 4          # x in
                        + w_bytes                      # weights (once)
                        + int(b_packed.size) * 4       # biases (once)
                        + batch_pad * d_pad * 4),      # out
    )

    out_pad = pl.pallas_call(
        functools.partial(_mlp_kernel, n_layers=n_layers),
        out_shape=jax.ShapeDtypeStruct((batch_pad, d_pad), jnp.float32),
        grid=grid,
        in_specs=[
            # x: tiled over the batch grid axis.
            pl.BlockSpec((tm, d_pad), lambda i: (i, 0)),
            # packed weights / biases: full arrays, constant index -> DMA'd
            # once and resident across all grid steps.
            pl.BlockSpec((n_layers, d_pad, d_pad), lambda i: (0, 0, 0)),
            pl.BlockSpec((n_layers, d_pad), lambda i: (0, 0)),
        ],
        out_specs=pl.BlockSpec((tm, d_pad), lambda i: (i, 0)),
        compiler_params=pltpu.CompilerParams(
            dimension_semantics=("parallel",),     # megacore sharding on v7x
            vmem_limit_bytes=32 * 1024 * 1024,     # explicit; safe on v7x 64 MiB
        ),
        cost_estimate=cost,
    )(x_pad, w_packed, b_packed)

    # Strip batch + lane padding.
    return out_pad[:batch, :out_dim]


def init_params(key, layers):
    """Deterministic xavier-normal weights (gain=1.0) and zero biases,
    matching Net1.__init__ (xavier_normal_ is symmetric in fan_in/fan_out)."""
    weights, biases = [], []
    for i in range(len(layers) - 1):
        fan_in, fan_out = layers[i], layers[i + 1]
        key, sub = jax.random.split(key)
        std = math.sqrt(2.0 / (fan_in + fan_out))
        w = std * jax.random.normal(sub, (fan_in, fan_out), dtype=jnp.float32)
        b = jnp.zeros((1, fan_out), dtype=jnp.float32)
        weights.append(w)
        biases.append(b)
    return weights, biases


def net1_reference(x, weights, biases):
    """Pure-JAX reference: tanh on all layers except the last (Net1.forward)."""
    a = jnp.tanh(x @ weights[0] + biases[0])
    for i in range(1, len(weights) - 1):
        a = jnp.tanh(a @ weights[i] + biases[i])
    return a @ weights[-1] + biases[-1]


if __name__ == "__main__":
    # Net1(layers): 4 Linear layers, tanh between, last one linear.
    layers = [16, 32, 32, 32, 8]
    batch = 256

    key = jax.random.PRNGKey(0)
    key, kx = jax.random.split(key)
    x = jax.random.normal(kx, (batch, layers[0]), dtype=jnp.float32)

    weights, biases = init_params(key, layers)

    # One-time packing, hoisted out of the per-call path.
    w_packed, b_packed, _, out_dim = pack_params(weights, biases)

    # First call compiles; second call is the steady-state fast path.
    out = jax.block_until_ready(
        net1_forward(x, w_packed, b_packed, out_dim=out_dim))
    out = jax.block_until_ready(
        net1_forward(x, w_packed, b_packed, out_dim=out_dim))

    ref = net1_reference(x, weights, biases)
    assert out.shape == (batch, layers[-1])
    assert jnp.allclose(out, ref, atol=1e-5, rtol=1e-5), "mismatch vs reference"

    print("KERNEL_OK")
</pallas_src>

<mosaic_0001>
module attributes {stable_mosaic.version = 11 : i64} {
  func.func @_mlp_kernel(%arg0: i32, %arg1: memref<128x128xf32, #tpu.memory_space<vmem>>, %arg2: memref<4x128x128xf32, #tpu.memory_space<vmem>>, %arg3: memref<4x128xf32, #tpu.memory_space<vmem>>, %arg4: memref<128x128xf32, #tpu.memory_space<vmem>>) attributes {dimension_semantics = [#tpu.dimension_semantics<parallel>], iteration_bounds = array<i64: 2>, scalar_prefetch = 0 : i64, scratch_operands = 0 : i64, tpu.core_type = #tpu.core_type<tc>, window_params = [{transform_indices = @transform_0, window_bounds = array<i64: 128, 128>}, {pipeline_mode = #tpu.pipeline_mode<synchronous>, transform_indices = @transform_1, window_bounds = array<i64: 4, 128, 128>}, {pipeline_mode = #tpu.pipeline_mode<synchronous>, transform_indices = @transform_2, window_bounds = array<i64: 4, 128>}, {transform_indices = @transform_3, window_bounds = array<i64: 128, 128>}]} {
    %c0 = arith.constant 0 : index
    %c0_0 = arith.constant 0 : index
    %0 = vector.load %arg1[%c0, %c0_0] : memref<128x128xf32, #tpu.memory_space<vmem>>, vector<128x128xf32>
    %c0_1 = arith.constant 0 : index
    %c0_2 = arith.constant 0 : index
    %c0_3 = arith.constant 0 : index
    %1 = vector.load %arg2[%c0_1, %c0_2, %c0_3] : memref<4x128x128xf32, #tpu.memory_space<vmem>>, vector<1x128x128xf32>
    %2 = vector.shape_cast %1 : vector<1x128x128xf32> to vector<128x128xf32>
    %c0_4 = arith.constant 0 : index
    %c0_5 = arith.constant 0 : index
    %3 = vector.load %arg3[%c0_4, %c0_5] : memref<4x128xf32, #tpu.memory_space<vmem>>, vector<1x128xf32>
    %cst = arith.constant dense<0.000000e+00> : vector<128x128xf32>
    %4 = tpu.matmul %0, %2, %cst {dimension_numbers = #tpu.dot_dimension_numbers<[1], [0], [0], [1], [0, 0, 1, 1], [], []>} : vector<128x128xf32>, vector<128x128xf32>, vector<128x128xf32> -> vector<128x128xf32>
    %5 = vector.broadcast %3 : vector<1x128xf32> to vector<128x128xf32>
    %6 = arith.addf %4, %5 : vector<128x128xf32>
    %7 = math.tanh %6 : vector<128x128xf32>
    %c1 = arith.constant 1 : index
    %c0_6 = arith.constant 0 : index
    %c0_7 = arith.constant 0 : index
    %8 = vector.load %arg2[%c1, %c0_6, %c0_7] : memref<4x128x128xf32, #tpu.memory_space<vmem>>, vector<1x128x128xf32>
    %9 = vector.shape_cast %8 : vector<1x128x128xf32> to vector<128x128xf32>
    %c1_8 = arith.constant 1 : index
    %c0_9 = arith.constant 0 : index
    %10 = vector.load %arg3[%c1_8, %c0_9] : memref<4x128xf32, #tpu.memory_space<vmem>>, vector<1x128xf32>
    %cst_10 = arith.constant dense<0.000000e+00> : vector<128x128xf32>
    %11 = tpu.matmul %7, %9, %cst_10 {dimension_numbers = #tpu.dot_dimension_numbers<[1], [0], [0], [1], [0, 0, 1, 1], [], []>} : vector<128x128xf32>, vector<128x128xf32>, vector<128x128xf32> -> vector<128x128xf32>
    %12 = vector.broadcast %10 : vector<1x128xf32> to vector<128x128xf32>
    %13 = arith.addf %11, %12 : vector<128x128xf32>
    %14 = math.tanh %13 : vector<128x128xf32>
    %c2 = arith.constant 2 : index
    %c0_11 = arith.constant 0 : index
    %c0_12 = arith.constant 0 : index
    %15 = vector.load %arg2[%c2, %c0_11, %c0_12] : memref<4x128x128xf32, #tpu.memory_space<vmem>>, vector<1x128x128xf32>
    %16 = vector.shape_cast %15 : vector<1x128x128xf32> to vector<128x128xf32>
    %c2_13 = arith.constant 2 : index
    %c0_14 = arith.constant 0 : index
    %17 = vector.load %arg3[%c2_13, %c0_14] : memref<4x128xf32, #tpu.memory_space<vmem>>, vector<1x128xf32>
    %cst_15 = arith.constant dense<0.000000e+00> : vector<128x128xf32>
    %18 = tpu.matmul %14, %16, %cst_15 {dimension_numbers = #tpu.dot_dimension_numbers<[1], [0], [0], [1], [0, 0, 1, 1], [], []>} : vector<128x128xf32>, vector<128x128xf32>, vector<128x128xf32> -> vector<128x128xf32>
    %19 = vector.broadcast %17 : vector<1x128xf32> to vector<128x128xf32>
    %20 = arith.addf %18, %19 : vector<128x128xf32>
    %21 = math.tanh %20 : vector<128x128xf32>
    %c3 = arith.constant 3 : index
    %c0_16 = arith.constant 0 : index
    %c0_17 = arith.constant 0 : index
    %22 = vector.load %arg2[%c3, %c0_16, %c0_17] : memref<4x128x128xf32, #tpu.memory_space<vmem>>, vector<1x128x128xf32>
    %23 = vector.shape_cast %22 : vector<1x128x128xf32> to vector<128x128xf32>
    %c3_18 = arith.constant 3 : index
    %c0_19 = arith.constant 0 : index
    %24 = vector.load %arg3[%c3_18, %c0_19] : memref<4x128xf32, #tpu.memory_space<vmem>>, vector<1x128xf32>
    %cst_20 = arith.constant dense<0.000000e+00> : vector<128x128xf32>
    %25 = tpu.matmul %21, %23, %cst_20 {dimension_numbers = #tpu.dot_dimension_numbers<[1], [0], [0], [1], [0, 0, 1, 1], [], []>} : vector<128x128xf32>, vector<128x128xf32>, vector<128x128xf32> -> vector<128x128xf32>
    %26 = vector.broadcast %24 : vector<1x128xf32> to vector<128x128xf32>
    %27 = arith.addf %25, %26 : vector<128x128xf32>
    %c0_21 = arith.constant 0 : index
    %c0_22 = arith.constant 0 : index
    %28 = vector.load %arg4[%c0_21, %c0_22] : memref<128x128xf32, #tpu.memory_space<vmem>>, vector<128x128xf32>
    tpu.vector_store %arg4[%c0_21, %c0_22], %27 {strides = array<i32>} : memref<128x128xf32, #tpu.memory_space<vmem>>, vector<128x128xf32>,
    return
  }
  func.func @transform_0(%arg0: i32) -> (i32, i32) {
    %c0_i32 = arith.constant 0 : i32
    %c0_i32_0 = arith.constant 0 : i32
    return %arg0, %c0_i32 : i32, i32
  }
  func.func @transform_1(%arg0: i32) -> (i32, i32, i32) {
    %c0_i32 = arith.constant 0 : i32
    %c0_i32_0 = arith.constant 0 : i32
    %c0_i32_1 = arith.constant 0 : i32
    %c0_i32_2 = arith.constant 0 : i32
    return %c0_i32, %c0_i32_0, %c0_i32_1 : i32, i32, i32
  }
  func.func @transform_2(%arg0: i32) -> (i32, i32) {
    %c0_i32 = arith.constant 0 : i32
    %c0_i32_0 = arith.constant 0 : i32
    %c0_i32_1 = arith.constant 0 : i32
    return %c0_i32, %c0_i32_0 : i32, i32
  }
  func.func @transform_3(%arg0: i32) -> (i32, i32) {
    %c0_i32 = arith.constant 0 : i32
    %c0_i32_0 = arith.constant 0 : i32
    return %arg0, %c0_i32 : i32, i32
  }
}

</mosaic_0001>

<llo_original>
// kernel: net1_forward.1
$region0: #{net1_forward.1}
  #allocation0 [shape = 'u32[]', space=smem, size = 0x4, offset = 0x4, fixed_abs, tag = 'smem constant byte address 0x4 - core index']
  #allocation1 [shape = 'u32[144,128]{1,0:T(1,128)}', space=vmem, size = 0x12000, scoped, tag = 'internal scratch']
  %s0 = inlined_call_operand.vmem [shape: f32[256,128], index: 0, kind: input, shape index: {}]
  %s1 = inlined_call_operand.vmem [shape: f32[4,128,128], index: 1, kind: input, shape index: {}]
  %s2 = inlined_call_operand.vmem [shape: f32[4,128], index: 2, kind: input, shape index: {}]
  %s3 = inlined_call_operand.vmem [shape: f32[256,128], index: 3, kind: output, shape index: {}]
  %s4 = sld [smem:[#allocation0]]
  $region45: #{net1_forward.1} parent=0
    _
  %s6 = ssub.s32 1, %s4
  %s7 = scalar_select 0, %s6, %s4
  loop: start=0, step=1, limit=4
  $region2: #{net1_forward.1} parent=0 // loop_pre_header
    _
  $region3: #{net1_forward.1} parent=0 // loop_header
    %s9 = sphi 0, %s13
    %p10 = scmp.ge.s32.totalorder %s9, 4
    %s19 = sphi 0, %s21
    %s22 = sphi 0, %s19
    %s23 = sphi 0, %s22
    %s39 = sphi 0, %s23
    %s43 = sphi 0, %s43
    %s45 = sphi 0, %s43
    %s46 = sphi 0, %s45
    %s60 = sphi 0, %s46
    %s64 = sphi 0, %s64
    %s66 = sphi 0, %s64
    %s67 = sphi 0, %s66
    %s81 = sphi 0, %s67
    %s87 = sphi 0, %s89
    %s90 = sphi 0, %s87
    %s91 = sphi 0, %s90
    %s107 = sphi 0, %s91
  $region4: #{net1_forward.1} parent=0 // loop_header_branch
    %12 = sbr.rel (%p10) target = $region8
  $region5: #{net1_forward.1} parent=0 // loop_body
    %s14 = ssub.s32 %s9, 1
    %s15 = ssub.s32 %s9, 2
    %s16 = sadd.s32 %s9, 1
    %s17 = ssub.s32 %s9, %s16
    %p18 = scmp.eq.s32.totalorder %s17, 0
    %s20 = sadd.s32 %s19, 1
    %s21 = scalar_select %p18, %s19, %s20
    %p24 = pneg %p18
    %p25 = scmp.eq.s32.totalorder %s9, 1
    %p26 = por %p24, %p25
    %p27 = scmp.ne.s32.totalorder %s19, %s22
    %p28 = scmp.eq.s32.totalorder %s9, 0
    %p29 = por %p27, %p28
    %p30 = scmp.ne.s32.totalorder %s19, %s22
    %p31 = scmp.eq.s32.totalorder %s14, 1
    %p32 = por %p30, %p31
    %p33 = scmp.ne.s32.totalorder %s22, %s23
    %p34 = scmp.eq.s32.totalorder %s14, 0
    %p35 = por %p33, %p34
    %p36 = scmp.ne.s32.totalorder %s22, %s23
    %p37 = scmp.eq.s32.totalorder %s15, 1
    %p38 = por %p36, %p37
    %p40 = scmp.ne.s32.totalorder %s23, %s39
    %p41 = scmp.eq.s32.totalorder %s15, 0
    %p42 = por %p40, %p41
    %s44 = sadd.s32 %s43, 1
    %p47 = scmp.eq.s32.totalorder %s9, 1
    %p48 = scmp.ne.s32.totalorder %s43, %s45
    %p49 = scmp.eq.s32.totalorder %s9, 0
    %p50 = por %p48, %p49
    %p51 = scmp.ne.s32.totalorder %s43, %s45
    %p52 = scmp.eq.s32.totalorder %s14, 1
    %p53 = por %p51, %p52
    %p54 = scmp.ne.s32.totalorder %s45, %s46
    %p55 = scmp.eq.s32.totalorder %s14, 0
    %p56 = por %p54, %p55
    %p57 = scmp.ne.s32.totalorder %s45, %s46
    %p58 = scmp.eq.s32.totalorder %s15, 1
    %p59 = por %p57, %p58
    %p61 = scmp.ne.s32.totalorder %s46, %s60
    %p62 = scmp.eq.s32.totalorder %s15, 0
    %p63 = por %p61, %p62
    %s65 = sadd.s32 %s64, 1
    %p68 = scmp.eq.s32.totalorder %s9, 1
    %p69 = scmp.ne.s32.totalorder %s64, %s66
    %p70 = scmp.eq.s32.totalorder %s9, 0
    %p71 = por %p69, %p70
    %p72 = scmp.ne.s32.totalorder %s64, %s66
    %p73 = scmp.eq.s32.totalorder %s14, 1
    %p74 = por %p72, %p73
    %p75 = scmp.ne.s32.totalorder %s66, %s67
    %p76 = scmp.eq.s32.totalorder %s14, 0
    %p77 = por %p75, %p76
    %p78 = scmp.ne.s32.totalorder %s66, %s67
    %p79 = scmp.eq.s32.totalorder %s15, 1
    %p80 = por %p78, %p79
    %p82 = scmp.ne.s32.totalorder %s67, %s81
    %p83 = scmp.eq.s32.totalorder %s15, 0
    %p84 = por %p82, %p83
    %s85 = ssub.s32 %s9, %s16
    %p86 = scmp.eq.s32.totalorder %s85, 0
    %s88 = sadd.s32 %s87, 1
    %s89 = scalar_select %p86, %s87, %s88
    %p92 = pneg %p86
    %p93 = scmp.eq.s32.totalorder %s9, 1
    %p94 = por %p92, %p93
    %p95 = scmp.ne.s32.totalorder %s87, %s90
    %p96 = scmp.eq.s32.totalorder %s9, 0
    %p97 = por %p95, %p96
    %p98 = scmp.ne.s32.totalorder %s87, %s90
    %p99 = scmp.eq.s32.totalorder %s14, 1
    %p100 = por %p98, %p99
    %p101 = scmp.ne.s32.totalorder %s90, %s91
    %p102 = scmp.eq.s32.totalorder %s14, 0
    %p103 = por %p101, %p102
    %p104 = scmp.ne.s32.totalorder %s90, %s91
    %p105 = scmp.eq.s32.totalorder %s15, 1
    %p106 = por %p104, %p105
    %p108 = scmp.ne.s32.totalorder %s91, %s107
    %p109 = scmp.eq.s32.totalorder %s15, 0
    %p110 = por %p108, %p109
    %p111 = scmp.le.s32.totalorder 1, %s9
    %p112 = scmp.lt.s32.totalorder %s9, 3
    %p113 = pnand %p111, %p112
    %p114 = pneg %p113
    // Predicated region
    $region9: #{net1_forward.1} parent=5 // pred_check
      _
    $region10: #{net1_forward.1} parent=5 // pred_check_branch
      %116 = sbr.rel (%p113) target = $region12
    $region11: #{net1_forward.1} parent=5 // pred_region
      %s117 = ssub.s32 %s9, 1
      // Predicated region
      $region13: #{net1_forward.1} parent=11 // pred_check
        %p118 = pneg %p56
      $region14: #{net1_forward.1} parent=11 // pred_check_branch
        %120 = sbr.rel (%p118) target = $region16
      $region15: #{net1_forward.1} parent=11 // pred_region
        _
      $region16: #{net1_forward.1} parent=11 // pred_fallthru
        _
      // Predicated region
      $region17: #{net1_forward.1} parent=11 // pred_check
        %p121 = pneg %p77
      $region18: #{net1_forward.1} parent=11 // pred_check_branch
        %123 = sbr.rel (%p121) target = $region20
      $region19: #{net1_forward.1} parent=11 // pred_region
        _
      $region20: #{net1_forward.1} parent=11 // pred_fallthru
        _
    $region12: #{net1_forward.1} parent=5 // pred_fallthru
      _
    %p124 = scmp.lt.s32.totalorder %s9, 2
    // Predicated region
    $region21: #{net1_forward.1} parent=5 // pred_check
      %p125 = pneg %p124
    $region22: #{net1_forward.1} parent=5 // pred_check_branch
      %127 = sbr.rel (%p125) target = $region24
    $region23: #{net1_forward.1} parent=5 // pred_region
      // Predicated region
      $region25: #{net1_forward.1} parent=23 // pred_check
        %p128 = pneg %p29
      $region26: #{net1_forward.1} parent=23 // pred_check_branch
        %130 = sbr.rel (%p128) target = $region28
      $region27: #{net1_forward.1} parent=23 // pred_region
        %s131 = smul.u32 16, %s9
        %p132 = scmp.lt.s32.totalorder %s131, 31
        %s133 = scalar_select %p132, %s131, 31
        %s134 = smul.addr %s133, 8
        %s135 = scalar_lea.vmem %s0, %s134
        %s136 = smul.u32 16, %s9
      $region28: #{net1_forward.1} parent=23 // pred_fallthru
        _
    $region24: #{net1_forward.1} parent=5 // pred_fallthru
      _
    %p137 = scmp.le.s32.totalorder 1, %s9
    %p138 = scmp.lt.s32.totalorder %s9, 3
    %p139 = pnand %p137, %p138
    %p140 = pneg %p139
    // Predicated region
    $region29: #{net1_forward.1} parent=5 // pred_check
      _
    $region30: #{net1_forward.1} parent=5 // pred_check_branch
      %142 = sbr.rel (%p139) target = $region32
    $region31: #{net1_forward.1} parent=5 // pred_region
      %s143 = ssub.s32 %s9, 1
      %s144 = smul.u32 16, %s14
      %p145 = scmp.lt.s32.totalorder %s144, 31
      %s146 = scalar_select %p145, %s144, 31
      %s147 = smul.addr %s146, 8
      %s148 = scalar_lea.vmem %s0, %s147
      %p149 = pneg %p35
      %p150 = pneg %p32
      %p151 = pneg %p56
      %p152 = pneg %p53
      %p153 = pneg %p77
      %p154 = pneg %p74
      %p155 = pneg %p103
      %p156 = pneg %p100
      %s157 = smul.u32 16, %s14
      %p158 = scmp.lt.s32.totalorder %s157, 31
      %s159 = scalar_select %p158, %s157, 31
      %s160 = smul.addr %s159, 8
      %s161 = scalar_lea.vmem %s3, %s160
      %s162 = smul.u32 16, %s14
      %p163 = scmp.lt.s32.totalorder %s162, 31
      %s164 = scalar_select %p163, %s162, 31
      %s165 = smul.addr %s164, 8
      %s166 = scalar_lea.vmem %s0, %s165
      %s167 = smul.u32 16, %s14
      %s168 = smul.u32 16, %s14
      %p169 = scmp.lt.s32.totalorder %s168, 31
      %s170 = scalar_select %p169, %s168, 31
      %s171 = smul.addr %s170, 8
      %s172 = scalar_lea.vmem %s3, %s171
      %s173 = smul.u32 16, %s14
      %v174 = vld [vmem:[%s166] sm:$0xff]
      %v175 = vld [vmem:[%s166 + $0x8] sm:$0xff]
      %v176 = vld [vmem:[%s166 + $0x10] sm:$0xff]
      %v177 = vld [vmem:[%s166 + $0x18] sm:$0xff]
      %v178 = vld [vmem:[%s166 + $0x20] sm:$0xff]
      %v179 = vld [vmem:[%s166 + $0x28] sm:$0xff]
      %v180 = vld [vmem:[%s166 + $0x30] sm:$0xff]
      %v181 = vld [vmem:[%s166 + $0x38] sm:$0xff]
      %v182 = vld [vmem:[%s166 + $0x40] sm:$0xff]
      %v183 = vld [vmem:[%s166 + $0x48] sm:$0xff]
      %v184 = vld [vmem:[%s166 + $0x50] sm:$0xff]
      %v185 = vld [vmem:[%s166 + $0x58] sm:$0xff]
      %v186 = vld [vmem:[%s166 + $0x60] sm:$0xff]
      %v187 = vld [vmem:[%s166 + $0x68] sm:$0xff]
      %v188 = vld [vmem:[%s166 + $0x70] sm:$0xff]
      %v189 = vld [vmem:[%s166 + $0x78] sm:$0xff]
      %v190 = vld [vmem:[%s1] sm:$0xff]
      %v191 = vld [vmem:[%s1 + $0x8] sm:$0xff]
      %v192 = vld [vmem:[%s1 + $0x10] sm:$0xff]
      %v193 = vld [vmem:[%s1 + $0x18] sm:$0xff]
      %v194 = vld [vmem:[%s1 + $0x20] sm:$0xff]
      %v195 = vld [vmem:[%s1 + $0x28] sm:$0xff]
      %v196 = vld [vmem:[%s1 + $0x30] sm:$0xff]
      %v197 = vld [vmem:[%s1 + $0x38] sm:$0xff]
      %v198 = vld [vmem:[%s1 + $0x40] sm:$0xff]
      %v199 = vld [vmem:[%s1 + $0x48] sm:$0xff]
      %v200 = vld [vmem:[%s1 + $0x50] sm:$0xff]
      %v201 = vld [vmem:[%s1 + $0x58] sm:$0xff]
      %v202 = vld [vmem:[%s1 + $0x60] sm:$0xff]
      %v203 = vld [vmem:[%s1 + $0x68] sm:$0xff]
      %v204 = vld [vmem:[%s1 + $0x70] sm:$0xff]
      %v205 = vld [vmem:[%s1 + $0x78] sm:$0xff]
      %v206 = vld [vmem:[%s2] sm:$0x1]
      %v207 = vlaneseq
      %v208 = vshrl.u32 %v207, 7
      %v209 = vsub.s32 0, %v208
      %v210 = vrot.slane %v206, %v209
      %211 = vmatprep.subr.mxu0 0.0
      %212 = vmatpush1.msra.mxu0 %v205
      %213 = vmatprep.subr.mxu0 0.0
      %214 = vmatpush1.msra.mxu0 %v204
      %215 = vmatprep.subr.mxu0 0.0
      %216 = vmatpush1.msra.mxu0 %v203
      %217 = vmatprep.subr.mxu0 0.0
      %218 = vmatpush1.msra.mxu0 %v202
      %219 = vmatprep.subr.mxu0 0.0
      %220 = vmatpush1.msra.mxu0 %v201
      %221 = vmatprep.subr.mxu0 0.0
      %222 = vmatpush1.msra.mxu0 %v200
      %223 = vmatprep.subr.mxu0 0.0
      %224 = vmatpush1.msra.mxu0 %v199
      %225 = vmatprep.subr.mxu0 0.0
      %226 = vmatpush1.msra.mxu0 %v198
      %227 = vmatprep.subr.mxu0 0.0
      %228 = vmatpush1.msra.mxu0 %v197
      %229 = vmatprep.subr.mxu0 0.0
      %230 = vmatpush1.msra.mxu0 %v196
      %231 = vmatprep.subr.mxu0 0.0
      %232 = vmatpush1.msra.mxu0 %v195
      %233 = vmatprep.subr.mxu0 0.0
      %234 = vmatpush1.msra.mxu0 %v194
      %235 = vmatprep.subr.mxu0 0.0
      %236 = vmatpush1.msra.mxu0 %v193
      %237 = vmatprep.subr.mxu0 0.0
      %238 = vmatpush1.msra.mxu0 %v192
      %239 = vmatprep.subr.mxu0 0.0
      %240 = vmatpush1.msra.mxu0 %v191
      %241 = vmatprep.subr.mxu0 0.0
      %242 = vmatpush1.msra.mxu0 %v190
      %243 = vmatprep.subr.mxu0 0.0
      %244 = vmatpush2.msra.mxu0 0.0
      %245 = vmatprep.subr.mxu0 0.0
      %246 = vmatpush2.msra.mxu0 0.0
      %247 = vmatprep.subr.mxu0 0.0
      %248 = vmatpush2.msra.mxu0 0.0
      %249 = vmatprep.subr.mxu0 0.0
      %250 = vmatpush2.msra.mxu0 0.0
      %251 = vmatprep.subr.mxu0 0.0
      %252 = vmatpush2.msra.mxu0 0.0
      %253 = vmatprep.subr.mxu0 0.0
      %254 = vmatpush2.msra.mxu0 0.0
      %255 = vmatprep.subr.mxu0 0.0
      %256 = vmatpush2.msra.mxu0 0.0
      %257 = vmatprep.subr.mxu0 0.0
      %258 = vmatpush2.msra.mxu0 0.0
      %259 = vmatprep.subr.mxu0 0.0
      %260 = vmatpush2.msra.mxu0 0.0
      %261 = vmatprep.subr.mxu0 0.0
      %262 = vmatpush2.msra.mxu0 0.0
      %263 = vmatprep.subr.mxu0 0.0
      %264 = vmatpush2.msra.mxu0 0.0
      %265 = vmatprep.subr.mxu0 0.0
      %266 = vmatpush2.msra.mxu0 0.0
      %267 = vmatprep.subr.mxu0 0.0
      %268 = vmatpush2.msra.mxu0 0.0
      %269 = vmatprep.subr.mxu0 0.0
      %270 = vmatpush2.msra.mxu0 0.0
      %271 = vmatprep.subr.mxu0 0.0
      %272 = vmatpush2.msra.mxu0 0.0
      %273 = vmatprep.subr.mxu0 0.0
      %274 = vmatpush2.msra.mxu0 0.0
      %275 = vmatprep.mubr.f32.mxu0 0.0
      %276 = vmatmul.mubr.f32.gmra.mxu0 %v174
      %v277 = vpop.f32.mrf.mxu0
      %v278 = vadd.f32 %v210, %v277
      %v279 = vpop.f32.mrf.mxu0
      %280 = vmatprep.mubr.f32.mxu0 0.0
      %281 = vmatmul.mubr.f32.gmra.mxu0 %v175
      %v282 = vpop.f32.mrf.mxu0
      %v283 = vadd.f32 %v210, %v282
      %v284 = vpop.f32.mrf.mxu0
      %285 = vmatprep.mubr.f32.mxu0 0.0
      %286 = vmatmul.mubr.f32.gmra.mxu0 %v176
      %v287 = vpop.f32.mrf.mxu0
      %v288 = vadd.f32 %v210, %v287
      %v289 = vpop.f32.mrf.mxu0
      %290 = vmatprep.mubr.f32.mxu0 0.0
      %291 = vmatmul.mubr.f32.gmra.mxu0 %v177
      %v292 = vpop.f32.mrf.mxu0
      %v293 = vadd.f32 %v210, %v292
      %v294 = vpop.f32.mrf.mxu0
      %295 = vmatprep.mubr.f32.mxu0 0.0
      %296 = vmatmul.mubr.f32.gmra.mxu0 %v178
      %v297 = vpop.f32.mrf.mxu0
      %v298 = vadd.f32 %v210, %v297
      %v299 = vpop.f32.mrf.mxu0
      %300 = vmatprep.mubr.f32.mxu0 0.0
      %301 = vmatmul.mubr.f32.gmra.mxu0 %v179
      %v302 = vpop.f32.mrf.mxu0
      %v303 = vadd.f32 %v210, %v302
      %v304 = vpop.f32.mrf.mxu0
      %305 = vmatprep.mubr.f32.mxu0 0.0
      %306 = vmatmul.mubr.f32.gmra.mxu0 %v180
      %v307 = vpop.f32.mrf.mxu0
      %v308 = vadd.f32 %v210, %v307
      %v309 = vpop.f32.mrf.mxu0
      %310 = vmatprep.mubr.f32.mxu0 0.0
      %311 = vmatmul.mubr.f32.gmra.mxu0 %v181
      %v312 = vpop.f32.mrf.mxu0
      %v313 = vadd.f32 %v210, %v312
      %v314 = vpop.f32.mrf.mxu0
      %315 = vmatprep.mubr.f32.mxu0 0.0
      %316 = vmatmul.mubr.f32.gmra.mxu0 %v182
      %v317 = vpop.f32.mrf.mxu0
      %v318 = vadd.f32 %v210, %v317
      %v319 = vpop.f32.mrf.mxu0
      %320 = vmatprep.mubr.f32.mxu0 0.0
      %321 = vmatmul.mubr.f32.gmra.mxu0 %v183
      %v322 = vpop.f32.mrf.mxu0
      %v323 = vadd.f32 %v210, %v322
      %v324 = vpop.f32.mrf.mxu0
      %325 = vmatprep.mubr.f32.mxu0 0.0
      %326 = vmatmul.mubr.f32.gmra.mxu0 %v184
      %v327 = vpop.f32.mrf.mxu0
      %v328 = vadd.f32 %v210, %v327
      %v329 = vpop.f32.mrf.mxu0
      %330 = vmatprep.mubr.f32.mxu0 0.0
      %331 = vmatmul.mubr.f32.gmra.mxu0 %v185
      %v332 = vpop.f32.mrf.mxu0
      %v333 = vadd.f32 %v210, %v332
      %v334 = vpop.f32.mrf.mxu0
      %335 = vmatprep.mubr.f32.mxu0 0.0
      %336 = vmatmul.mubr.f32.gmra.mxu0 %v186
      %v337 = vpop.f32.mrf.mxu0
      %v338 = vadd.f32 %v210, %v337
      %v339 = vpop.f32.mrf.mxu0
      %340 = vmatprep.mubr.f32.mxu0 0.0
      %341 = vmatmul.mubr.f32.gmra.mxu0 %v187
      %v342 = vpop.f32.mrf.mxu0
      %v343 = vadd.f32 %v210, %v342
      %v344 = vpop.f32.mrf.mxu0
      %345 = vmatprep.mubr.f32.mxu0 0.0
      %346 = vmatmul.mubr.f32.gmra.mxu0 %v188
      %v347 = vpop.f32.mrf.mxu0
      %v348 = vadd.f32 %v210, %v347
      %v349 = vpop.f32.mrf.mxu0
      %350 = vmatprep.mubr.f32.mxu0 0.0
      %351 = vmatmul.mubr.f32.gmra.mxu0 %v189
      %v352 = vpop.f32.mrf.mxu0
      %v353 = vadd.f32 %v210, %v352
      %v354 = vpop.f32.mrf.mxu0
      %355 = vdwg.mxu0
      %v356 = vtanh.pop %v278
      %v357 = vtanh.pop %v283
      %v358 = vtanh.pop %v288
      %v359 = vtanh.pop %v293
      %v360 = vtanh.pop %v298
      %v361 = vtanh.pop %v303
      %v362 = vtanh.pop %v308
      %v363 = vtanh.pop %v313
      %v364 = vtanh.pop %v318
      %v365 = vtanh.pop %v323
      %v366 = vtanh.pop %v328
      %v367 = vtanh.pop %v333
      %v368 = vtanh.pop %v338
      %v369 = vtanh.pop %v343
      %v370 = vtanh.pop %v348
      %v371 = vtanh.pop %v353
      %s372 = scalar_lea.vmem %s1, 128
      %v373 = vld [vmem:[%s372] sm:$0xff]
      %v374 = vld [vmem:[%s372 + $0x8] sm:$0xff]
      %v375 = vld [vmem:[%s372 + $0x10] sm:$0xff]
      %v376 = vld [vmem:[%s372 + $0x18] sm:$0xff]
      %v377 = vld [vmem:[%s372 + $0x20] sm:$0xff]
      %v378 = vld [vmem:[%s372 + $0x28] sm:$0xff]
      %v379 = vld [vmem:[%s372 + $0x30] sm:$0xff]
      %v380 = vld [vmem:[%s372 + $0x38] sm:$0xff]
      %v381 = vld [vmem:[%s372 + $0x40] sm:$0xff]
      %v382 = vld [vmem:[%s372 + $0x48] sm:$0xff]
      %v383 = vld [vmem:[%s372 + $0x50] sm:$0xff]
      %v384 = vld [vmem:[%s372 + $0x58] sm:$0xff]
      %v385 = vld [vmem:[%s372 + $0x60] sm:$0xff]
      %v386 = vld [vmem:[%s372 + $0x68] sm:$0xff]
      %v387 = vld [vmem:[%s372 + $0x70] sm:$0xff]
      %v388 = vld [vmem:[%s372 + $0x78] sm:$0xff]
      %v389 = vld [vmem:[%s2 + $0x1] sm:$0x1]
      %v390 = vlaneseq
      %v391 = vshrl.u32 %v390, 7
      %v392 = vsub.s32 0, %v391
      %v393 = vrot.slane %v389, %v392
      %394 = vmatprep.subr.mxu0 0.0
      %395 = vmatpush1.msra.mxu0 %v388
      %396 = vmatprep.subr.mxu0 0.0
      %397 = vmatpush1.msra.mxu0 %v387
      %398 = vmatprep.subr.mxu0 0.0
      %399 = vmatpush1.msra.mxu0 %v386
      %400 = vmatprep.subr.mxu0 0.0
      %401 = vmatpush1.msra.mxu0 %v385
      %402 = vmatprep.subr.mxu0 0.0
      %403 = vmatpush1.msra.mxu0 %v384
      %404 = vmatprep.subr.mxu0 0.0
      %405 = vmatpush1.msra.mxu0 %v383
      %406 = vmatprep.subr.mxu0 0.0
      %407 = vmatpush1.msra.mxu0 %v382
      %408 = vmatprep.subr.mxu0 0.0
      %409 = vmatpush1.msra.mxu0 %v381
      %410 = vmatprep.subr.mxu0 0.0
      %411 = vmatpush1.msra.mxu0 %v380
      %412 = vmatprep.subr.mxu0 0.0
      %413 = vmatpush1.msra.mxu0 %v379
      %414 = vmatprep.subr.mxu0 0.0
      %415 = vmatpush1.msra.mxu0 %v378
      %416 = vmatprep.subr.mxu0 0.0
      %417 = vmatpush1.msra.mxu0 %v377
      %418 = vmatprep.subr.mxu0 0.0
      %419 = vmatpush1.msra.mxu0 %v376
      %420 = vmatprep.subr.mxu0 0.0
      %421 = vmatpush1.msra.mxu0 %v375
      %422 = vmatprep.subr.mxu0 0.0
      %423 = vmatpush1.msra.mxu0 %v374
      %424 = vmatprep.subr.mxu0 0.0
      %425 = vmatpush1.msra.mxu0 %v373
      %426 = vmatprep.subr.mxu0 0.0
      %427 = vmatpush2.msra.mxu0 0.0
      %428 = vmatprep.subr.mxu0 0.0
      %429 = vmatpush2.msra.mxu0 0.0
      %430 = vmatprep.subr.mxu0 0.0
      %431 = vmatpush2.msra.mxu0 0.0
      %432 = vmatprep.subr.mxu0 0.0
      %433 = vmatpush2.msra.mxu0 0.0
      %434 = vmatprep.subr.mxu0 0.0
      %435 = vmatpush2.msra.mxu0 0.0
      %436 = vmatprep.subr.mxu0 0.0
      %437 = vmatpush2.msra.mxu0 0.0
      %438 = vmatprep.subr.mxu0 0.0
      %439 = vmatpush2.msra.mxu0 0.0
      %440 = vmatprep.subr.mxu0 0.0
      %441 = vmatpush2.msra.mxu0 0.0
      %442 = vmatprep.subr.mxu0 0.0
      %443 = vmatpush2.msra.mxu0 0.0
      %444 = vmatprep.subr.mxu0 0.0
      %445 = vmatpush2.msra.mxu0 0.0
      %446 = vmatprep.subr.mxu0 0.0
      %447 = vmatpush2.msra.mxu0 0.0
      %448 = vmatprep.subr.mxu0 0.0
      %449 = vmatpush2.msra.mxu0 0.0
      %450 = vmatprep.subr.mxu0 0.0
      %451 = vmatpush2.msra.mxu0 0.0
      %452 = vmatprep.subr.mxu0 0.0
      %453 = vmatpush2.msra.mxu0 0.0
      %454 = vmatprep.subr.mxu0 0.0
      %455 = vmatpush2.msra.mxu0 0.0
      %456 = vmatprep.subr.mxu0 0.0
      %457 = vmatpush2.msra.mxu0 0.0
      %458 = vmatprep.mubr.f32.mxu0 0.0
      %459 = vmatmul.mubr.f32.gmra.mxu0 %v356
      %v460 = vpop.f32.mrf.mxu0
      %v461 = vadd.f32 %v393, %v460
      %v462 = vpop.f32.mrf.mxu0
      %463 = vmatprep.mubr.f32.mxu0 0.0
      %464 = vmatmul.mubr.f32.gmra.mxu0 %v357
      %v465 = vpop.f32.mrf.mxu0
      %v466 = vadd.f32 %v393, %v465
      %v467 = vpop.f32.mrf.mxu0
      %468 = vmatprep.mubr.f32.mxu0 0.0
      %469 = vmatmul.mubr.f32.gmra.mxu0 %v358
      %v470 = vpop.f32.mrf.mxu0
      %v471 = vadd.f32 %v393, %v470
      %v472 = vpop.f32.mrf.mxu0
      %473 = vmatprep.mubr.f32.mxu0 0.0
      %474 = vmatmul.mubr.f32.gmra.mxu0 %v359
      %v475 = vpop.f32.mrf.mxu0
      %v476 = vadd.f32 %v393, %v475
      %v477 = vpop.f32.mrf.mxu0
      %478 = vmatprep.mubr.f32.mxu0 0.0
      %479 = vmatmul.mubr.f32.gmra.mxu0 %v360
      %v480 = vpop.f32.mrf.mxu0
      %v481 = vadd.f32 %v393, %v480
      %v482 = vpop.f32.mrf.mxu0
      %483 = vmatprep.mubr.f32.mxu0 0.0
      %484 = vmatmul.mubr.f32.gmra.mxu0 %v361
      %v485 = vpop.f32.mrf.mxu0
      %v486 = vadd.f32 %v393, %v485
      %v487 = vpop.f32.mrf.mxu0
      %488 = vmatprep.mubr.f32.mxu0 0.0
      %489 = vmatmul.mubr.f32.gmra.mxu0 %v362
      %v490 = vpop.f32.mrf.mxu0
      %v491 = vadd.f32 %v393, %v490
      %v492 = vpop.f32.mrf.mxu0
      %493 = vmatprep.mubr.f32.mxu0 0.0
      %494 = vmatmul.mubr.f32.gmra.mxu0 %v363
      %v495 = vpop.f32.mrf.mxu0
      %v496 = vadd.f32 %v393, %v495
      %v497 = vpop.f32.mrf.mxu0
      %498 = vmatprep.mubr.f32.mxu0 0.0
      %499 = vmatmul.mubr.f32.gmra.mxu0 %v364
      %v500 = vpop.f32.mrf.mxu0
      %v501 = vadd.f32 %v393, %v500
      %v502 = vpop.f32.mrf.mxu0
      %503 = vmatprep.mubr.f32.mxu0 0.0
      %504 = vmatmul.mubr.f32.gmra.mxu0 %v365
      %v505 = vpop.f32.mrf.mxu0
      %v506 = vadd.f32 %v393, %v505
      %v507 = vpop.f32.mrf.mxu0
      %508 = vmatprep.mubr.f32.mxu0 0.0
      %509 = vmatmul.mubr.f32.gmra.mxu0 %v366
      %v510 = vpop.f32.mrf.mxu0
      %v511 = vadd.f32 %v393, %v510
      %v512 = vpop.f32.mrf.mxu0
      %513 = vmatprep.mubr.f32.mxu0 0.0
      %514 = vmatmul.mubr.f32.gmra.mxu0 %v367
      %v515 = vpop.f32.mrf.mxu0
      %v516 = vadd.f32 %v393, %v515
      %v517 = vpop.f32.mrf.mxu0
      %518 = vmatprep.mubr.f32.mxu0 0.0
      %519 = vmatmul.mubr.f32.gmra.mxu0 %v368
      %v520 = vpop.f32.mrf.mxu0
      %v521 = vadd.f32 %v393, %v520
      %v522 = vpop.f32.mrf.mxu0
      %523 = vmatprep.mubr.f32.mxu0 0.0
      %524 = vmatmul.mubr.f32.gmra.mxu0 %v369
      %v525 = vpop.f32.mrf.mxu0
      %v526 = vadd.f32 %v393, %v525
      %v527 = vpop.f32.mrf.mxu0
      %528 = vmatprep.mubr.f32.mxu0 0.0
      %529 = vmatmul.mubr.f32.gmra.mxu0 %v370
      %v530 = vpop.f32.mrf.mxu0
      %v531 = vadd.f32 %v393, %v530
      %v532 = vpop.f32.mrf.mxu0
      %533 = vmatprep.mubr.f32.mxu0 0.0
      %534 = vmatmul.mubr.f32.gmra.mxu0 %v371
      %v535 = vpop.f32.mrf.mxu0
      %v536 = vadd.f32 %v393, %v535
      %v537 = vpop.f32.mrf.mxu0
      %538 = vdwg.mxu0
      %v539 = vtanh.pop %v461
      %v540 = vtanh.pop %v466
      %v541 = vtanh.pop %v471
      %v542 = vtanh.pop %v476
      %v543 = vtanh.pop %v481
      %v544 = vtanh.pop %v486
      %v545 = vtanh.pop %v491
      %v546 = vtanh.pop %v496
      %v547 = vtanh.pop %v501
      %v548 = vtanh.pop %v506
      %v549 = vtanh.pop %v511
      %v550 = vtanh.pop %v516
      %v551 = vtanh.pop %v521
      %v552 = vtanh.pop %v526
      %v553 = vtanh.pop %v531
      %v554 = vtanh.pop %v536
      %s555 = scalar_lea.vmem %s1, 256
      %v556 = vld [vmem:[%s555] sm:$0xff]
      %v557 = vld [vmem:[%s555 + $0x8] sm:$0xff]
      %v558 = vld [vmem:[%s555 + $0x10] sm:$0xff]
      %v559 = vld [vmem:[%s555 + $0x18] sm:$0xff]
      %v560 = vld [vmem:[%s555 + $0x20] sm:$0xff]
      %v561 = vld [vmem:[%s555 + $0x28] sm:$0xff]
      %v562 = vld [vmem:[%s555 + $0x30] sm:$0xff]
      %v563 = vld [vmem:[%s555 + $0x38] sm:$0xff]
      %v564 = vld [vmem:[%s555 + $0x40] sm:$0xff]
      %v565 = vld [vmem:[%s555 + $0x48] sm:$0xff]
      %v566 = vld [vmem:[%s555 + $0x50] sm:$0xff]
      %v567 = vld [vmem:[%s555 + $0x58] sm:$0xff]
      %v568 = vld [vmem:[%s555 + $0x60] sm:$0xff]
      %v569 = vld [vmem:[%s555 + $0x68] sm:$0xff]
      %v570 = vld [vmem:[%s555 + $0x70] sm:$0xff]
      %v571 = vld [vmem:[%s555 + $0x78] sm:$0xff]
      %v572 = vld [vmem:[%s2 + $0x2] sm:$0x1]
      %v573 = vlaneseq
      %v574 = vshrl.u32 %v573, 7
      %v575 = vsub.s32 0, %v574
      %v576 = vrot.slane %v572, %v575
      %577 = vmatprep.subr.mxu0 0.0
      %578 = vmatpush1.msra.mxu0 %v571
      %579 = vmatprep.subr.mxu0 0.0
      %580 = vmatpush1.msra.mxu0 %v570
      %581 = vmatprep.subr.mxu0 0.0
      %582 = vmatpush1.msra.mxu0 %v569
      %583 = vmatprep.subr.mxu0 0.0
      %584 = vmatpush1.msra.mxu0 %v568
      %585 = vmatprep.subr.mxu0 0.0
      %586 = vmatpush1.msra.mxu0 %v567
      %587 = vmatprep.subr.mxu0 0.0
      %588 = vmatpush1.msra.mxu0 %v566
      %589 = vmatprep.subr.mxu0 0.0
      %590 = vmatpush1.msra.mxu0 %v565
      %591 = vmatprep.subr.mxu0 0.0
      %592 = vmatpush1.msra.mxu0 %v564
      %593 = vmatprep.subr.mxu0 0.0
      %594 = vmatpush1.msra.mxu0 %v563
      %595 = vmatprep.subr.mxu0 0.0
      %596 = vmatpush1.msra.mxu0 %v562
      %597 = vmatprep.subr.mxu0 0.0
      %598 = vmatpush1.msra.mxu0 %v561
      %599 = vmatprep.subr.mxu0 0.0
      %600 = vmatpush1.msra.mxu0 %v560
      %601 = vmatprep.subr.mxu0 0.0
      %602 = vmatpush1.msra.mxu0 %v559
      %603 = vmatprep.subr.mxu0 0.0
      %604 = vmatpush1.msra.mxu0 %v558
      %605 = vmatprep.subr.mxu0 0.0
      %606 = vmatpush1.msra.mxu0 %v557
      %607 = vmatprep.subr.mxu0 0.0
      %608 = vmatpush1.msra.mxu0 %v556
      %609 = vmatprep.subr.mxu0 0.0
      %610 = vmatpush2.msra.mxu0 0.0
      %611 = vmatprep.subr.mxu0 0.0
      %612 = vmatpush2.msra.mxu0 0.0
      %613 = vmatprep.subr.mxu0 0.0
      %614 = vmatpush2.msra.mxu0 0.0
      %615 = vmatprep.subr.mxu0 0.0
      %616 = vmatpush2.msra.mxu0 0.0
      %617 = vmatprep.subr.mxu0 0.0
      %618 = vmatpush2.msra.mxu0 0.0
      %619 = vmatprep.subr.mxu0 0.0
      %620 = vmatpush2.msra.mxu0 0.0
      %621 = vmatprep.subr.mxu0 0.0
      %622 = vmatpush2.msra.mxu0 0.0
      %623 = vmatprep.subr.mxu0 0.0
      %624 = vmatpush2.msra.mxu0 0.0
      %625 = vmatprep.subr.mxu0 0.0
      %626 = vmatpush2.msra.mxu0 0.0
      %627 = vmatprep.subr.mxu0 0.0
      %628 = vmatpush2.msra.mxu0 0.0
      %629 = vmatprep.subr.mxu0 0.0
      %630 = vmatpush2.msra.mxu0 0.0
      %631 = vmatprep.subr.mxu0 0.0
      %632 = vmatpush2.msra.mxu0 0.0
      %633 = vmatprep.subr.mxu0 0.0
      %634 = vmatpush2.msra.mxu0 0.0
      %635 = vmatprep.subr.mxu0 0.0
      %636 = vmatpush2.msra.mxu0 0.0
      %637 = vmatprep.subr.mxu0 0.0
      %638 = vmatpush2.msra.mxu0 0.0
      %639 = vmatprep.subr.mxu0 0.0
      %640 = vmatpush2.msra.mxu0 0.0
      %641 = vmatprep.mubr.f32.mxu0 0.0
      %642 = vmatmul.mubr.f32.gmra.mxu0 %v539
      %v643 = vpop.f32.mrf.mxu0
      %v644 = vadd.f32 %v576, %v643
      %v645 = vpop.f32.mrf.mxu0
      %646 = vmatprep.mubr.f32.mxu0 0.0
      %647 = vmatmul.mubr.f32.gmra.mxu0 %v540
      %v648 = vpop.f32.mrf.mxu0
      %v649 = vadd.f32 %v576, %v648
      %v650 = vpop.f32.mrf.mxu0
      %651 = vmatprep.mubr.f32.mxu0 0.0
      %652 = vmatmul.mubr.f32.gmra.mxu0 %v541
      %v653 = vpop.f32.mrf.mxu0
      %v654 = vadd.f32 %v576, %v653
      %v655 = vpop.f32.mrf.mxu0
      %656 = vmatprep.mubr.f32.mxu0 0.0
      %657 = vmatmul.mubr.f32.gmra.mxu0 %v542
      %v658 = vpop.f32.mrf.mxu0
      %v659 = vadd.f32 %v576, %v658
      %v660 = vpop.f32.mrf.mxu0
      %661 = vmatprep.mubr.f32.mxu0 0.0
      %662 = vmatmul.mubr.f32.gmra.mxu0 %v543
      %v663 = vpop.f32.mrf.mxu0
      %v664 = vadd.f32 %v576, %v663
      %v665 = vpop.f32.mrf.mxu0
      %666 = vmatprep.mubr.f32.mxu0 0.0
      %667 = vmatmul.mubr.f32.gmra.mxu0 %v544
      %v668 = vpop.f32.mrf.mxu0
      %v669 = vadd.f32 %v576, %v668
      %v670 = vpop.f32.mrf.mxu0
      %671 = vmatprep.mubr.f32.mxu0 0.0
      %672 = vmatmul.mubr.f32.gmra.mxu0 %v545
      %v673 = vpop.f32.mrf.mxu0
      %v674 = vadd.f32 %v576, %v673
      %v675 = vpop.f32.mrf.mxu0
      %676 = vmatprep.mubr.f32.mxu0 0.0
      %677 = vmatmul.mubr.f32.gmra.mxu0 %v546
      %v678 = vpop.f32.mrf.mxu0
      %v679 = vadd.f32 %v576, %v678
      %v680 = vpop.f32.mrf.mxu0
      %681 = vmatprep.mubr.f32.mxu0 0.0
      %682 = vmatmul.mubr.f32.gmra.mxu0 %v547
      %v683 = vpop.f32.mrf.mxu0
      %v684 = vadd.f32 %v576, %v683
      %v685 = vpop.f32.mrf.mxu0
      %686 = vmatprep.mubr.f32.mxu0 0.0
      %687 = vmatmul.mubr.f32.gmra.mxu0 %v548
      %v688 = vpop.f32.mrf.mxu0
      %v689 = vadd.f32 %v576, %v688
      %v690 = vpop.f32.mrf.mxu0
      %691 = vmatprep.mubr.f32.mxu0 0.0
      %692 = vmatmul.mubr.f32.gmra.mxu0 %v549
      %v693 = vpop.f32.mrf.mxu0
      %v694 = vadd.f32 %v576, %v693
      %v695 = vpop.f32.mrf.mxu0
      %696 = vmatprep.mubr.f32.mxu0 0.0
      %697 = vmatmul.mubr.f32.gmra.mxu0 %v550
      %v698 = vpop.f32.mrf.mxu0
      %v699 = vadd.f32 %v576, %v698
      %v700 = vpop.f32.mrf.mxu0
      %701 = vmatprep.mubr.f32.mxu0 0.0
      %702 = vmatmul.mubr.f32.gmra.mxu0 %v551
      %v703 = vpop.f32.mrf.mxu0
      %v704 = vadd.f32 %v576, %v703
      %v705 = vpop.f32.mrf.mxu0
      %706 = vmatprep.mubr.f32.mxu0 0.0
      %707 = vmatmul.mubr.f32.gmra.mxu0 %v552
      %v708 = vpop.f32.mrf.mxu0
      %v709 = vadd.f32 %v576, %v708
      %v710 = vpop.f32.mrf.mxu0
      %711 = vmatprep.mubr.f32.mxu0 0.0
      %712 = vmatmul.mubr.f32.gmra.mxu0 %v553
      %v713 = vpop.f32.mrf.mxu0
      %v714 = vadd.f32 %v576, %v713
      %v715 = vpop.f32.mrf.mxu0
      %716 = vmatprep.mubr.f32.mxu0 0.0
      %717 = vmatmul.mubr.f32.gmra.mxu0 %v554
      %v718 = vpop.f32.mrf.mxu0
      %v719 = vadd.f32 %v576, %v718
      %v720 = vpop.f32.mrf.mxu0
      %721 = vdwg.mxu0
      %v722 = vtanh.pop %v644
      %v723 = vtanh.pop %v649
      %v724 = vtanh.pop %v654
      %v725 = vtanh.pop %v659
      %v726 = vtanh.pop %v664
      %v727 = vtanh.pop %v669
      %v728 = vtanh.pop %v674
      %v729 = vtanh.pop %v679
      %v730 = vtanh.pop %v684
      %v731 = vtanh.pop %v689
      %v732 = vtanh.pop %v694
      %v733 = vtanh.pop %v699
      %v734 = vtanh.pop %v704
      %v735 = vtanh.pop %v709
      %v736 = vtanh.pop %v714
      %v737 = vtanh.pop %v719
      %s738 = scalar_lea.vmem %s1, 384
      %v739 = vld [vmem:[%s738] sm:$0xff]
      %v740 = vld [vmem:[%s738 + $0x8] sm:$0xff]
      %v741 = vld [vmem:[%s738 + $0x10] sm:$0xff]
      %v742 = vld [vmem:[%s738 + $0x18] sm:$0xff]
      %v743 = vld [vmem:[%s738 + $0x20] sm:$0xff]
      %v744 = vld [vmem:[%s738 + $0x28] sm:$0xff]
      %v745 = vld [vmem:[%s738 + $0x30] sm:$0xff]
      %v746 = vld [vmem:[%s738 + $0x38] sm:$0xff]
      %v747 = vld [vmem:[%s738 + $0x40] sm:$0xff]
      %v748 = vld [vmem:[%s738 + $0x48] sm:$0xff]
      %v749 = vld [vmem:[%s738 + $0x50] sm:$0xff]
      %v750 = vld [vmem:[%s738 + $0x58] sm:$0xff]
      %v751 = vld [vmem:[%s738 + $0x60] sm:$0xff]
      %v752 = vld [vmem:[%s738 + $0x68] sm:$0xff]
      %v753 = vld [vmem:[%s738 + $0x70] sm:$0xff]
      %v754 = vld [vmem:[%s738 + $0x78] sm:$0xff]
      %v755 = vld [vmem:[%s2 + $0x3] sm:$0x1]
      %v756 = vlaneseq
      %v757 = vshrl.u32 %v756, 7
      %v758 = vsub.s32 0, %v757
      %v759 = vrot.slane %v755, %v758
      %760 = vmatprep.subr.mxu0 0.0
      %761 = vmatpush1.msra.mxu0 %v754
      %762 = vmatprep.subr.mxu0 0.0
      %763 = vmatpush1.msra.mxu0 %v753
      %764 = vmatprep.subr.mxu0 0.0
      %765 = vmatpush1.msra.mxu0 %v752
      %766 = vmatprep.subr.mxu0 0.0
      %767 = vmatpush1.msra.mxu0 %v751
      %768 = vmatprep.subr.mxu0 0.0
      %769 = vmatpush1.msra.mxu0 %v750
      %770 = vmatprep.subr.mxu0 0.0
      %771 = vmatpush1.msra.mxu0 %v749
      %772 = vmatprep.subr.mxu0 0.0
      %773 = vmatpush1.msra.mxu0 %v748
      %774 = vmatprep.subr.mxu0 0.0
      %775 = vmatpush1.msra.mxu0 %v747
      %776 = vmatprep.subr.mxu0 0.0
      %777 = vmatpush1.msra.mxu0 %v746
      %778 = vmatprep.subr.mxu0 0.0
      %779 = vmatpush1.msra.mxu0 %v745
      %780 = vmatprep.subr.mxu0 0.0
      %781 = vmatpush1.msra.mxu0 %v744
      %782 = vmatprep.subr.mxu0 0.0
      %783 = vmatpush1.msra.mxu0 %v743
      %784 = vmatprep.subr.mxu0 0.0
      %785 = vmatpush1.msra.mxu0 %v742
      %786 = vmatprep.subr.mxu0 0.0
      %787 = vmatpush1.msra.mxu0 %v741
      %788 = vmatprep.subr.mxu0 0.0
      %789 = vmatpush1.msra.mxu0 %v740
      %790 = vmatprep.subr.mxu0 0.0
      %791 = vmatpush1.msra.mxu0 %v739
      %792 = vmatprep.subr.mxu0 0.0
      %793 = vmatpush2.msra.mxu0 0.0
      %794 = vmatprep.subr.mxu0 0.0
      %795 = vmatpush2.msra.mxu0 0.0
      %796 = vmatprep.subr.mxu0 0.0
      %797 = vmatpush2.msra.mxu0 0.0
      %798 = vmatprep.subr.mxu0 0.0
      %799 = vmatpush2.msra.mxu0 0.0
      %800 = vmatprep.subr.mxu0 0.0
      %801 = vmatpush2.msra.mxu0 0.0
      %802 = vmatprep.subr.mxu0 0.0
      %803 = vmatpush2.msra.mxu0 0.0
      %804 = vmatprep.subr.mxu0 0.0
      %805 = vmatpush2.msra.mxu0 0.0
      %806 = vmatprep.subr.mxu0 0.0
      %807 = vmatpush2.msra.mxu0 0.0
      %808 = vmatprep.subr.mxu0 0.0
      %809 = vmatpush2.msra.mxu0 0.0
      %810 = vmatprep.subr.mxu0 0.0
      %811 = vmatpush2.msra.mxu0 0.0
      %812 = vmatprep.subr.mxu0 0.0
      %813 = vmatpush2.msra.mxu0 0.0
      %814 = vmatprep.subr.mxu0 0.0
      %815 = vmatpush2.msra.mxu0 0.0
      %816 = vmatprep.subr.mxu0 0.0
      %817 = vmatpush2.msra.mxu0 0.0
      %818 = vmatprep.subr.mxu0 0.0
      %819 = vmatpush2.msra.mxu0 0.0
      %820 = vmatprep.subr.mxu0 0.0
      %821 = vmatpush2.msra.mxu0 0.0
      %822 = vmatprep.subr.mxu0 0.0
      %823 = vmatpush2.msra.mxu0 0.0
      %824 = vmatprep.mubr.f32.mxu0 0.0
      %825 = vmatmul.mubr.f32.gmra.mxu0 %v722
      %v826 = vpop.f32.mrf.mxu0
      %v827 = vadd.f32 %v759, %v826
      %v828 = vpop.f32.mrf.mxu0
      %829 = vmatprep.mubr.f32.mxu0 0.0
      %830 = vmatmul.mubr.f32.gmra.mxu0 %v723
      %v831 = vpop.f32.mrf.mxu0
      %v832 = vadd.f32 %v759, %v831
      %v833 = vpop.f32.mrf.mxu0
      %834 = vmatprep.mubr.f32.mxu0 0.0
      %835 = vmatmul.mubr.f32.gmra.mxu0 %v724
      %v836 = vpop.f32.mrf.mxu0
      %v837 = vadd.f32 %v759, %v836
      %v838 = vpop.f32.mrf.mxu0
      %839 = vmatprep.mubr.f32.mxu0 0.0
      %840 = vmatmul.mubr.f32.gmra.mxu0 %v725
      %v841 = vpop.f32.mrf.mxu0
      %v842 = vadd.f32 %v759, %v841
      %v843 = vpop.f32.mrf.mxu0
      %844 = vmatprep.mubr.f32.mxu0 0.0
      %845 = vmatmul.mubr.f32.gmra.mxu0 %v726
      %v846 = vpop.f32.mrf.mxu0
      %v847 = vadd.f32 %v759, %v846
      %v848 = vpop.f32.mrf.mxu0
      %849 = vmatprep.mubr.f32.mxu0 0.0
      %850 = vmatmul.mubr.f32.gmra.mxu0 %v727
      %v851 = vpop.f32.mrf.mxu0
      %v852 = vadd.f32 %v759, %v851
      %v853 = vpop.f32.mrf.mxu0
      %854 = vmatprep.mubr.f32.mxu0 0.0
      %855 = vmatmul.mubr.f32.gmra.mxu0 %v728
      %v856 = vpop.f32.mrf.mxu0
      %v857 = vadd.f32 %v759, %v856
      %v858 = vpop.f32.mrf.mxu0
      %859 = vmatprep.mubr.f32.mxu0 0.0
      %860 = vmatmul.mubr.f32.gmra.mxu0 %v729
      %v861 = vpop.f32.mrf.mxu0
      %v862 = vadd.f32 %v759, %v861
      %v863 = vpop.f32.mrf.mxu0
      %864 = vmatprep.mubr.f32.mxu0 0.0
      %865 = vmatmul.mubr.f32.gmra.mxu0 %v730
      %v866 = vpop.f32.mrf.mxu0
      %v867 = vadd.f32 %v759, %v866
      %v868 = vpop.f32.mrf.mxu0
      %869 = vmatprep.mubr.f32.mxu0 0.0
      %870 = vmatmul.mubr.f32.gmra.mxu0 %v731
      %v871 = vpop.f32.mrf.mxu0
      %v872 = vadd.f32 %v759, %v871
      %v873 = vpop.f32.mrf.mxu0
      %874 = vmatprep.mubr.f32.mxu0 0.0
      %875 = vmatmul.mubr.f32.gmra.mxu0 %v732
      %v876 = vpop.f32.mrf.mxu0
      %v877 = vadd.f32 %v759, %v876
      %v878 = vpop.f32.mrf.mxu0
      %879 = vmatprep.mubr.f32.mxu0 0.0
      %880 = vmatmul.mubr.f32.gmra.mxu0 %v733
      %v881 = vpop.f32.mrf.mxu0
      %v882 = vadd.f32 %v759, %v881
      %v883 = vpop.f32.mrf.mxu0
      %884 = vmatprep.mubr.f32.mxu0 0.0
      %885 = vmatmul.mubr.f32.gmra.mxu0 %v734
      %v886 = vpop.f32.mrf.mxu0
      %v887 = vadd.f32 %v759, %v886
      %v888 = vpop.f32.mrf.mxu0
      %889 = vmatprep.mubr.f32.mxu0 0.0
      %890 = vmatmul.mubr.f32.gmra.mxu0 %v735
      %v891 = vpop.f32.mrf.mxu0
      %v892 = vadd.f32 %v759, %v891
      %v893 = vpop.f32.mrf.mxu0
      %894 = vmatprep.mubr.f32.mxu0 0.0
      %895 = vmatmul.mubr.f32.gmra.mxu0 %v736
      %v896 = vpop.f32.mrf.mxu0
      %v897 = vadd.f32 %v759, %v896
      %v898 = vpop.f32.mrf.mxu0
      %899 = vmatprep.mubr.f32.mxu0 0.0
      %900 = vmatmul.mubr.f32.gmra.mxu0 %v737
      %v901 = vpop.f32.mrf.mxu0
      %v902 = vadd.f32 %v759, %v901
      %v903 = vpop.f32.mrf.mxu0
      %904 = vdwg.mxu0
      %905 = vst [vmem:[%s172] sm:$0xff] %v827
      %906 = vst [vmem:[%s172 + $0x8] sm:$0xff] %v832
      %907 = vst [vmem:[%s172 + $0x10] sm:$0xff] %v837
      %908 = vst [vmem:[%s172 + $0x18] sm:$0xff] %v842
      %909 = vst [vmem:[%s172 + $0x20] sm:$0xff] %v847
      %910 = vst [vmem:[%s172 + $0x28] sm:$0xff] %v852
      %911 = vst [vmem:[%s172 + $0x30] sm:$0xff] %v857
      %912 = vst [vmem:[%s172 + $0x38] sm:$0xff] %v862
      %913 = vst [vmem:[%s172 + $0x40] sm:$0xff] %v867
      %914 = vst [vmem:[%s172 + $0x48] sm:$0xff] %v872
      %915 = vst [vmem:[%s172 + $0x50] sm:$0xff] %v877
      %916 = vst [vmem:[%s172 + $0x58] sm:$0xff] %v882
      %917 = vst [vmem:[%s172 + $0x60] sm:$0xff] %v887
      %918 = vst [vmem:[%s172 + $0x68] sm:$0xff] %v892
      %919 = vst [vmem:[%s172 + $0x70] sm:$0xff] %v897
      %920 = vst [vmem:[%s172 + $0x78] sm:$0xff] %v902
      %s921 = smul.u32 16, %s14
      %p922 = scmp.lt.s32.totalorder %s921, 31
      %s923 = scalar_select %p922, %s921, 31
      %s924 = smul.addr %s923, 8
      %s925 = scalar_lea.vmem %s3, %s924
      // Predicated region
      $region33: #{net1_forward.1} parent=31 // pred_check
        %p926 = pneg %p100
      $region34: #{net1_forward.1} parent=31 // pred_check_branch
        %928 = sbr.rel (%p926) target = $region36
      $region35: #{net1_forward.1} parent=31 // pred_region
        %s929 = smul.u32 16, %s14
      $region36: #{net1_forward.1} parent=31 // pred_fallthru
        _
    $region32: #{net1_forward.1} parent=5 // pred_fallthru
      _
    %p930 = scmp.le.s32.totalorder 2, %s9
    // Predicated region
    $region37: #{net1_forward.1} parent=5 // pred_check
      %p931 = pneg %p930
    $region38: #{net1_forward.1} parent=5 // pred_check_branch
      %933 = sbr.rel (%p931) target = $region40
    $region39: #{net1_forward.1} parent=5 // pred_region
      %s934 = ssub.s32 %s9, 2
      // Predicated region
      $region41: #{net1_forward.1} parent=39 // pred_check
        %p935 = pneg %p106
      $region42: #{net1_forward.1} parent=39 // pred_check_branch
        %937 = sbr.rel (%p935) target = $region44
      $region43: #{net1_forward.1} parent=39 // pred_region
        %s938 = smul.u32 16, %s15
        %p939 = scmp.lt.s32.totalorder %s938, 31
        %s940 = scalar_select %p939, %s938, 31
        %s941 = smul.addr %s940, 8
        %s942 = scalar_lea.vmem %s3, %s941
      $region44: #{net1_forward.1} parent=39 // pred_fallthru
        _
    $region40: #{net1_forward.1} parent=5 // pred_fallthru
      _
  $region6: #{net1_forward.1} parent=0 // loop_footer
    %s13 = sadd.s32 1, %s9
  $region7: #{net1_forward.1} parent=0 // loop_footer_branch
    %8 = sbr.rel target = $region3
  $region8: #{net1_forward.1} parent=0 // loop_exit
    _

</llo_original>
